<compile_context>
chip_gen: v6e
topology: v6e:2x2x1
jax: 0.10.0
libtpu: 0.0.40
codegen_flags: <defaults>
</compile_context>

<pallas_src>
import functools

import jax
import jax.numpy as jnp
import numpy as np
from jax import lax
from jax.experimental import pallas as pl
from jax.experimental.pallas import tpu as pltpu


def _logit_mse_kernel(pred_ref, ref_ref, acc_ref, *,
                      target, n_valid, tile_n, chunk,
                      n_half_blocks, any_masking):
    """Accumulates lane-dense partial sums of (pred + (1-2*ref)*target)^2.

    pred_ref / ref_ref : (tile_bc, tile_n) block of the flattened (B*C, N) arrays.
    acc_ref            : (1, tile_bc, 128) float32 accumulator block, resident
                         across the reduction (last) grid axis.
    """
    s = pl.program_id(0)            # lane-split axis ("parallel", size 1 or 2)
    j = pl.program_id(2)            # reduction axis (innermost)
    first = j == 0

    blk = s * n_half_blocks + j     # logical lane-block index
    block_start = blk * tile_n      # first logical lane covered by this block

    t = jnp.float32(target)
    m2t = jnp.float32(-2.0 * target)
    n_sub = tile_n // chunk
    lanes_per = chunk // 128
    tile_bc = acc_ref.shape[1]

    def partial_sum(use_mask):
        if use_mask:
            # Built once per body (JAX does not CSE broadcast_in_dim).
            base_iota = lax.broadcasted_iota(jnp.int32, (tile_bc, chunk), 1)

        def one_chunk(c, acc):
            off = c * chunk
            if not isinstance(off, int):
                off = pl.multiple_of(off, 128)
            p = pred_ref[:, pl.ds(off, chunk)].astype(jnp.float32)
            r = ref_ref[:, pl.ds(off, chunk)].astype(jnp.float32)
            z = (p + t) + m2t * r             # == p + (1 - 2r) * target
            z2 = z * z
            if use_mask:
                lane = base_iota + (block_start + off)
                # Select (not multiply) so unspecified OOB lanes never propagate.
                z2 = jnp.where(lane < n_valid, z2, 0.0)
            for k in range(lanes_per):        # fold lanes into one 128-wide strip
                acc = acc + z2[:, k * 128:(k + 1) * 128]
            return acc

        acc0 = jnp.zeros((tile_bc, 128), jnp.float32)
        if n_sub <= 8:                        # short: static unroll
            acc = acc0
            for c in range(n_sub):
                acc = one_chunk(c, acc)
            return acc
        # long: bounded unrolled loop keeps vreg live ranges in check
        return lax.fori_loop(0, n_sub, one_chunk, acc0, unroll=4)

    def accumulate(use_mask):
        s_total = partial_sum(use_mask)       # register-resident partial sum

        @pl.when(first)
        def _():
            acc_ref[0] = s_total              # plain store on first reduction step

        @pl.when(jnp.logical_not(first))
        def _():
            acc_ref[0] = acc_ref[0] + s_total # single RMW per grid step

    if any_masking:
        needs_mask = block_start + tile_n > n_valid

        @pl.when(needs_mask)
        def _():
            accumulate(True)

        @pl.when(jnp.logical_not(needs_mask))
        def _():
            accumulate(False)
    else:
        accumulate(False)


def _choose_tiles(BC, N, pred_itemsize, ref_itemsize):
    """Pick (tile_bc, tile_n, chunk).

    * tile_bc: full row count if small, else 256 (multiple of 16 -> safe sublane
      tiling for f32 and bf16).
    * tile_n : sized so pred-block + ref-block together stream ~8 MiB of HBM per
      grid step (~4 MiB per input at equal itemsize), dtype-aware.
    * chunk  : bounds per-chunk f32 temporaries to ~512 KiB so lane partial sums
      fold in vregs; multiple of 128 and divides tile_n.
    """
    tile_bc = BC if BC <= 256 else 256

    n_rounded = -(-N // 128) * 128            # round_up(N, 128)

    bytes_per_lane = tile_bc * (pred_itemsize + ref_itemsize)
    tn = max(128, ((8 << 20) // bytes_per_lane) // 128 * 128)
    tile_n = min(tn, n_rounded)

    chunk = max(128, min((((512 << 10) // (tile_bc * 4)) // 128) * 128, 4096))
    chunk = min(chunk, tile_n)
    while tile_n % chunk:                     # both multiples of 128 -> terminates
        chunk -= 128
    return tile_bc, tile_n, chunk


def logit_mse_loss(pred, ref, *, target=5.0, reduction="mean"):
    """Pallas implementation of LogitMSELoss.forward (one-hot path, no mask,
    weighted=False, no activation)."""
    if not jnp.issubdtype(ref.dtype, jnp.floating):
        # TODO(synk): integer label-map path (forward_labels) not implemented.
        raise NotImplementedError("Only the floating-point (one-hot) ref path "
                                  "is implemented.")

    B, C = pred.shape[0], pred.shape[1]
    N = int(np.prod(pred.shape[2:]))
    BC = B * C

    p = pred.reshape(BC, N)
    r = ref.reshape(BC, N)   # keep ref in its own dtype; upcast to f32 in-kernel

    tile_bc, tile_n, chunk = _choose_tiles(
        BC, N, p.dtype.itemsize, r.dtype.itemsize)

    row_blocks = pl.cdiv(BC, tile_bc)
    total_lane_blocks = pl.cdiv(N, tile_n)

    # Guarantee >= 2 parallel blocks (both v7x TensorCores busy) when the row
    # axis alone only yields one; harmless no-op on single-TC v5e / v6e.
    n_split = 2 if (row_blocks == 1 and total_lane_blocks >= 2) else 1
    n_half = pl.cdiv(total_lane_blocks, n_split)
    last_block = total_lane_blocks - 1

    grid = (n_split, row_blocks, n_half)
    any_masking = (n_split * n_half * tile_n) != N

    def lane_block(s_idx, j_idx):
        # Clamp so padding blocks past the real lane extent never DMA OOB;
        # their contribution is fully masked away in-kernel.
        return jnp.minimum(s_idx * n_half + j_idx, last_block)

    kernel = functools.partial(
        _logit_mse_kernel,
        target=float(target), n_valid=N,
        tile_n=tile_n, chunk=chunk,
        n_half_blocks=n_half, any_masking=any_masking)

    partial_sums = pl.pallas_call(
        kernel,
        out_shape=jax.ShapeDtypeStruct((n_split, BC, 128), jnp.float32),
        grid_spec=pltpu.PrefetchScalarGridSpec(
            num_scalar_prefetch=0,
            grid=grid,
            in_specs=[
                pl.BlockSpec((tile_bc, tile_n),
                             lambda s, i, j: (i, lane_block(s, j))),
                pl.BlockSpec((tile_bc, tile_n),
                             lambda s, i, j: (i, lane_block(s, j))),
            ],
            out_specs=pl.BlockSpec((1, tile_bc, 128),
                                   lambda s, i, j: (s, i, 0)),
        ),
        compiler_params=pltpu.CompilerParams(
            dimension_semantics=("parallel", "parallel", "arbitrary"),
            vmem_limit_bytes=32 * 1024 * 1024,
        ),
    )(p, r)

    # Tiny glue: per-(batch, class) finish + class/batch means.
    sums = partial_sums.sum(axis=(0, -1))        # (B*C,)
    loss = sums / jnp.float32(N)                 # (B*C,)
    loss = loss.reshape(B, C).mean(axis=-1)      # (B,)  -- weighted=False path

    if reduction is None or reduction is False:
        return loss
    if isinstance(reduction, str):
        red = reduction.lower()
        if red == "mean":
            return loss.mean()
        if red == "sum":
            return loss.sum()
        raise ValueError(f'Unknown reduction "{reduction}"')
    if callable(reduction):
        return reduction(loss)
    raise ValueError(f"Don't know what to do with reduction: {reduction}")


def _reference(pred, ref, target=5.0):
    """Pure-JAX reference mirroring the PyTorch forward_onehot path."""
    B, C = pred.shape[0], pred.shape[1]
    p = pred.reshape(B, C, -1).astype(jnp.float32)
    r = ref.reshape(B, C, -1).astype(jnp.float32)
    z = p + (1.0 - 2.0 * r) * target
    loss = jnp.sum(z * z, axis=-1) / p.shape[-1]   # (B, C)
    loss = loss.mean(axis=-1)                      # (B,)
    return loss.mean()                             # scalar ('mean' reduction)


if __name__ == "__main__":
    key = jax.random.PRNGKey(0)
    kp, kr = jax.random.split(key)

    B, C, H, W = 2, 4, 16, 16            # pred: (batch, nb_class, H, W)
    pred = jax.random.normal(kp, (B, C, H, W), dtype=jnp.float32)
    # Floating-point "reference classes" (expectation of one-hot), as in
    # forward_onehot; a hard one-hot is a special case of this.
    logits = jax.random.normal(kr, (B, C, H, W), dtype=jnp.float32)
    ref = jax.nn.softmax(logits, axis=1)

    out = logit_mse_loss(pred, ref, target=5.0, reduction="mean")
    out = jax.block_until_ready(out)

    expected = _reference(pred, ref, target=5.0)
    np.testing.assert_allclose(np.asarray(out), np.asarray(expected),
                               rtol=1e-5, atol=1e-5)
    print("KERNEL_OK")
</pallas_src>

<mosaic_0001>
module attributes {stable_mosaic.version = 11 : i64} {
  func.func @_logit_mse_kernel(%arg0: i32, %arg1: i32, %arg2: i32, %arg3: memref<8x256xf32, #tpu.memory_space<vmem>>, %arg4: memref<8x256xf32, #tpu.memory_space<vmem>>, %arg5: memref<1x8x128xf32, #tpu.memory_space<vmem>>) attributes {dimension_semantics = [#tpu.dimension_semantics<parallel>, #tpu.dimension_semantics<parallel>, #tpu.dimension_semantics<arbitrary>], iteration_bounds = array<i64: 1, 1, 1>, scalar_prefetch = 0 : i64, scratch_operands = 0 : i64, tpu.core_type = #tpu.core_type<tc>, window_params = [{transform_indices = @transform_0, window_bounds = array<i64: 8, 256>}, {transform_indices = @transform_1, window_bounds = array<i64: 8, 256>}, {transform_indices = @transform_2, window_bounds = array<i64: 1, 8, 128>}]} {
    %c0_i32 = arith.constant 0 : i32
    %0 = arith.cmpi eq, %arg2, %c0_i32 : i32
    %cst = arith.constant 0.000000e+00 : f32
    %1 = vector.broadcast %cst : f32 to vector<8x128xf32>
    %c0 = arith.constant 0 : index
    %c0_0 = arith.constant 0 : index
    %2 = vector.load %arg3[%c0, %c0_0] : memref<8x256xf32, #tpu.memory_space<vmem>>, vector<8x256xf32>
    %c0_1 = arith.constant 0 : index
    %c0_2 = arith.constant 0 : index
    %3 = vector.load %arg4[%c0_1, %c0_2] : memref<8x256xf32, #tpu.memory_space<vmem>>, vector<8x256xf32>
    %cst_3 = arith.constant 5.000000e+00 : f32
    %4 = vector.broadcast %cst_3 : f32 to vector<8x256xf32>
    %5 = arith.addf %2, %4 : vector<8x256xf32>
    %cst_4 = arith.constant -1.000000e+01 : f32
    %6 = vector.broadcast %cst_4 : f32 to vector<8x256xf32>
    %7 = arith.mulf %6, %3 : vector<8x256xf32>
    %8 = arith.addf %5, %7 : vector<8x256xf32>
    %9 = arith.mulf %8, %8 : vector<8x256xf32>
    %10 = vector.extract_strided_slice %9 {offsets = [0, 0], sizes = [8, 128], strides = [1, 1]} : vector<8x256xf32> to vector<8x128xf32>
    %11 = arith.addf %1, %10 : vector<8x128xf32>
    %12 = vector.extract_strided_slice %9 {offsets = [0, 128], sizes = [8, 128], strides = [1, 1]} : vector<8x256xf32> to vector<8x128xf32>
    %13 = arith.addf %11, %12 : vector<8x128xf32>
    %14 = arith.extui %0 : i1 to i32
    %c0_i32_5 = arith.constant 0 : i32
    %15 = arith.cmpi ne, %14, %c0_i32_5 : i32
    scf.if %15 {
      %c0_7 = arith.constant 0 : index
      %c0_8 = arith.constant 0 : index
      %c0_9 = arith.constant 0 : index
      %19 = vector.load %arg5[%c0_7, %c0_8, %c0_9] : memref<1x8x128xf32, #tpu.memory_space<vmem>>, vector<1x8x128xf32>
      %20 = vector.shape_cast %19 : vector<1x8x128xf32> to vector<8x128xf32>
      %21 = vector.shape_cast %13 : vector<8x128xf32> to vector<1x8x128xf32>
      tpu.vector_store %arg5[%c0_7, %c0_8, %c0_9], %21 {strides = array<i32>} : memref<1x8x128xf32, #tpu.memory_space<vmem>>, vector<1x8x128xf32>,
    } else {
    }
    %true = arith.constant true
    %16 = arith.xori %0, %true : i1
    %17 = arith.extui %16 : i1 to i32
    %c0_i32_6 = arith.constant 0 : i32
    %18 = arith.cmpi ne, %17, %c0_i32_6 : i32
    scf.if %18 {
      %c0_7 = arith.constant 0 : index
      %c0_8 = arith.constant 0 : index
      %c0_9 = arith.constant 0 : index
      %19 = vector.load %arg5[%c0_7, %c0_8, %c0_9] : memref<1x8x128xf32, #tpu.memory_space<vmem>>, vector<1x8x128xf32>
      %20 = vector.shape_cast %19 : vector<1x8x128xf32> to vector<8x128xf32>
      %21 = arith.addf %20, %13 : vector<8x128xf32>
      %c0_10 = arith.constant 0 : index
      %c0_11 = arith.constant 0 : index
      %c0_12 = arith.constant 0 : index
      %22 = vector.load %arg5[%c0_10, %c0_11, %c0_12] : memref<1x8x128xf32, #tpu.memory_space<vmem>>, vector<1x8x128xf32>
      %23 = vector.shape_cast %22 : vector<1x8x128xf32> to vector<8x128xf32>
      %24 = vector.shape_cast %21 : vector<8x128xf32> to vector<1x8x128xf32>
      tpu.vector_store %arg5[%c0_10, %c0_11, %c0_12], %24 {strides = array<i32>} : memref<1x8x128xf32, #tpu.memory_space<vmem>>, vector<1x8x128xf32>,
    } else {
    }
    return
  }
  func.func @transform_0(%arg0: i32, %arg1: i32, %arg2: i32) -> (i32, i32) {
    %c1_i32 = arith.constant 1 : i32
    %0 = arith.muli %arg0, %c1_i32 : i32
    %1 = arith.addi %0, %arg2 : i32
    %c0_i32 = arith.constant 0 : i32
    %2 = arith.minsi %1, %c0_i32 : i32
    %c0_i32_0 = arith.constant 0 : i32
    return %arg1, %2 : i32, i32
  }
  func.func @transform_1(%arg0: i32, %arg1: i32, %arg2: i32) -> (i32, i32) {
    %c1_i32 = arith.constant 1 : i32
    %0 = arith.muli %arg0, %c1_i32 : i32
    %1 = arith.addi %0, %arg2 : i32
    %c0_i32 = arith.constant 0 : i32
    %2 = arith.minsi %1, %c0_i32 : i32
    %c0_i32_0 = arith.constant 0 : i32
    return %arg1, %2 : i32, i32
  }
  func.func @transform_2(%arg0: i32, %arg1: i32, %arg2: i32) -> (i32, i32, i32) {
    %c0_i32 = arith.constant 0 : i32
    %c0_i32_0 = arith.constant 0 : i32
    return %arg0, %arg1, %c0_i32 : i32, i32, i32
  }
}

</mosaic_0001>

<llo_original>
// kernel: tpu_custom_call.1
$region0: #{tpu_custom_call.1}
  #allocation0 [shape = 'u32[]', space=smem, size = 0x4, offset = 0x4, fixed_abs, tag = 'smem constant byte address 0x4 - core index']
  #allocation1 [shape = 'u32[144,128]{1,0:T(1,128)}', space=vmem, size = 0x12000, scoped, tag = 'internal scratch']
  %s0 = inlined_call_operand.hbm [shape: f32[8,256], index: 0, kind: input, shape index: {}]
  %s1 = inlined_call_operand.hbm [shape: f32[8,256], index: 1, kind: input, shape index: {}]
  %s2 = inlined_call_operand.hbm [shape: f32[1,8,128], index: 2, kind: output, shape index: {}]
  %s3 = sld [smem:[#allocation0]]
  $region34: #{tpu_custom_call.1} parent=0
    _
  %s5 = ssub.s32 1, %s3
  %s6 = scalar_select 0, %s5, %s3
  $region1: #{tpu_custom_call.1} parent=0
    #allocation2 [shape = 'u8[8192]{0}', space=vmem, size = 0x2000, scoped, tag = 'input window, operand 0, single buffered']
    #allocation3 [shape = 's32[1]{0}', space=sflag, size = 0x4, scoped, tag = 'scoped memory for tpu_custom_call.1']
    #allocation4 [shape = 's32[1]{0}', space=sflag, size = 0x4, scoped, tag = 'scoped memory for tpu_custom_call.1']
    #allocation5 [shape = 'u8[8192]{0}', space=vmem, size = 0x2000, scoped, tag = 'input window, operand 1, single buffered']
    #allocation6 [shape = 's32[1]{0}', space=sflag, size = 0x4, scoped, tag = 'scoped memory for tpu_custom_call.1']
    #allocation7 [shape = 'u8[4096]{0}', space=vmem, size = 0x1000, scoped, tag = 'output window, operand 0, single buffered']
    %7 = vsyncpa [#allocation3], 0
    %8 = vsyncpa [#allocation6], 0
    %9 = vsyncpa [#allocation4], 0
    // Predicated region
    $region2: #{tpu_custom_call.1} parent=1 // pred_check
      _
    $region3: #{tpu_custom_call.1} parent=1 // pred_check_branch
      %11 = sbr.rel (0) target = $region5
    $region4: #{tpu_custom_call.1} parent=1 // pred_region
      %s12 = sadd.s32 0, 0
      %p13 = scmp.lt.s32.totalorder %s12, 0
      %s14 = scalar_select %p13, %s12, 0
      %s15 = smul.u32 2, %s14
      %s17 = ssub.s32 256, 256
      %18 = vsyncadd [#allocation3], %s17
      %s19 = smul.addr %s15, 128
      %s20 = scalar_lea.hbm %s0, %s19
      %s22 = sshll.u32 [#allocation2], 4
      %s23 = int_to_ptr.vmem [resolvable:$true] %s22
      %25 = dma.hbm_to_vmem [thread:$0]  %s20, 256, %s23, [#allocation3]
    $region5: #{tpu_custom_call.1} parent=1 // pred_fallthru
      _
    // Predicated region
    $region6: #{tpu_custom_call.1} parent=1 // pred_check
      _
    $region7: #{tpu_custom_call.1} parent=1 // pred_check_branch
      %27 = sbr.rel (0) target = $region9
    $region8: #{tpu_custom_call.1} parent=1 // pred_region
      %s28 = sadd.s32 0, 0
      %p29 = scmp.lt.s32.totalorder %s28, 0
      %s30 = scalar_select %p29, %s28, 0
      %s31 = smul.u32 2, %s30
      %s33 = ssub.s32 256, 256
      %34 = vsyncadd [#allocation6], %s33
      %s35 = smul.addr %s31, 128
      %s36 = scalar_lea.hbm %s1, %s35
      %s38 = sshll.u32 [#allocation5], 4
      %s39 = int_to_ptr.vmem [resolvable:$true] %s38
      %41 = dma.hbm_to_vmem [thread:$0]  %s36, 256, %s39, [#allocation6]
    $region9: #{tpu_custom_call.1} parent=1 // pred_fallthru
      _
    // Predicated region
    $region10: #{tpu_custom_call.1} parent=1 // pred_check
      _
    $region11: #{tpu_custom_call.1} parent=1 // pred_check_branch
      %43 = sbr.rel (0) target = $region13
    $region12: #{tpu_custom_call.1} parent=1 // pred_region
      %44 = dma.done [#allocation3], 256
    $region13: #{tpu_custom_call.1} parent=1 // pred_fallthru
      _
    // Predicated region
    $region14: #{tpu_custom_call.1} parent=1 // pred_check
      _
    $region15: #{tpu_custom_call.1} parent=1 // pred_check_branch
      %46 = sbr.rel (0) target = $region17
    $region16: #{tpu_custom_call.1} parent=1 // pred_region
      %47 = dma.done [#allocation6], 256
    $region17: #{tpu_custom_call.1} parent=1 // pred_fallthru
      _
    %s48 = sadd.s32 0, 0
    %p49 = scmp.lt.s32.totalorder %s48, 0
    %s50 = scalar_select %p49, %s48, 0
    %s51 = smul.u32 2, %s50
    %s52 = sadd.s32 0, 0
    %p53 = scmp.lt.s32.totalorder %s52, 0
    %s54 = scalar_select %p53, %s52, 0
    %s55 = smul.u32 2, %s54
    %p56 = scmp.eq.s32.totalorder 0, 0
    %v57 = vld [vmem:[#allocation2] sm:$0xff]
    %v58 = vld [vmem:[#allocation2 + $0x8] sm:$0xff]
    %v59 = vld [vmem:[#allocation5] sm:$0xff]
    %v60 = vld [vmem:[#allocation5 + $0x8] sm:$0xff]
    %v61 = vadd.f32 %v57, 5.0
    %v62 = vadd.f32 %v58, 5.0
    %v63 = vmul.f32 %v59, -10.0
    %v64 = vmul.f32 %v60, -10.0
    %v65 = vadd.f32 %v61, %v63
    %v66 = vadd.f32 %v62, %v64
    %v67 = vmul.f32 %v65, %v65
    %v68 = vmul.f32 %v66, %v66
    %v69 = vadd.f32 %v67, 0.0
    %v70 = vadd.f32 %v69, %v68
    // Predicated region
    $region18: #{tpu_custom_call.1} parent=1 // pred_check
      %p71 = pneg %p56
    $region19: #{tpu_custom_call.1} parent=1 // pred_check_branch
      %73 = sbr.rel (%p71) target = $region21
    $region20: #{tpu_custom_call.1} parent=1 // pred_region
      %74 = vst [vmem:[#allocation7] sm:$0xff] %v70
    $region21: #{tpu_custom_call.1} parent=1 // pred_fallthru
      _
    %p75 = scmp.ne.s32.totalorder 0, 0
    // Predicated region
    $region22: #{tpu_custom_call.1} parent=1 // pred_check
      %p76 = pneg %p75
    $region23: #{tpu_custom_call.1} parent=1 // pred_check_branch
      %78 = sbr.rel (%p76) target = $region25
    $region24: #{tpu_custom_call.1} parent=1 // pred_region
      %v79 = vld [vmem:[#allocation7] sm:$0xff]
      %v80 = vadd.f32 %v79, %v70
      %81 = vst [vmem:[#allocation7] sm:$0xff] %v80
    $region25: #{tpu_custom_call.1} parent=1 // pred_fallthru
      _
    // Predicated region
    $region26: #{tpu_custom_call.1} parent=1 // pred_check
      _
    $region27: #{tpu_custom_call.1} parent=1 // pred_check_branch
      %83 = sbr.rel (0) target = $region29
    $region28: #{tpu_custom_call.1} parent=1 // pred_region
      %s85 = ssub.s32 128, 128
      %86 = vsyncadd [#allocation4], %s85
      %s88 = sshll.u32 [#allocation7], 4
      %s89 = int_to_ptr.vmem [resolvable:$true] %s88
      %91 = dma.vmem_to_hbm [thread:$0]  %s89, 128, %s2, [#allocation4]
    $region29: #{tpu_custom_call.1} parent=1 // pred_fallthru
      _
    // Predicated region
    $region30: #{tpu_custom_call.1} parent=1 // pred_check
      _
    $region31: #{tpu_custom_call.1} parent=1 // pred_check_branch
      %93 = sbr.rel (0) target = $region33
    $region32: #{tpu_custom_call.1} parent=1 // pred_region
      %94 = dma.done [#allocation4], 128
    $region33: #{tpu_custom_call.1} parent=1 // pred_fallthru
      _
    %95 = vsyncpa [#allocation3], 1
    %96 = vsyncpa [#allocation6], 1
    %97 = vsyncpa [#allocation4], 1

</llo_original>
